<compile_context>
chip_gen: v7x
topology: tpu7x:2x2x1
jax: 0.10.0
libtpu: 0.0.40
codegen_flags: <defaults>
</compile_context>

<pallas_src>
import jax
import jax.numpy as jnp
from jax.experimental import pallas as pl
from jax.experimental.pallas import tpu as pltpu  # noqa: F401  (kept for TPU-specific tuning hooks)


def _identity_kernel(t_ref, o_ref):
    # Forward pass of TrainableTensor: return self.tensor (pure passthrough).
    o_ref[...] = t_ref[...]


def trainable_tensor_forward(tensor: jax.Array) -> jax.Array:
    """Preferred path per perf review: the forward is the parameter itself.

    No pallas_call, no DMAs, no optimization barrier — XLA can fuse the
    parameter directly into downstream consumers.
    """
    return tensor


def trainable_tensor_forward_pallas(tensor: jax.Array) -> jax.Array:
    """Pallas materialization of TrainableTensor.forward() (optional copy path)."""
    orig_shape = tensor.shape
    n = tensor.size

    # Present a lane-dense 2-D slab to the kernel so stores are full-width
    # (128-lane) vector stores.  (2, 4, 16, 16) f32 -> (16, 128).
    if n % 128 == 0:
        flat = tensor.reshape(n // 128, 128)
    else:
        # Fallback: single full-array block (block_shape == array dims is legal).
        flat = tensor.reshape(1, n)

    out = pl.pallas_call(
        _identity_kernel,
        out_shape=jax.ShapeDtypeStruct(flat.shape, flat.dtype),
        # No grid / no specs: single invocation, whole array staged in VMEM.
    )(flat)

    return out.reshape(orig_shape)


if __name__ == "__main__":
    # Deterministic parameter initialization (synthetic; no checkpoint loading).
    key = jax.random.PRNGKey(0)
    param = jax.random.normal(key, (2, 4, 16, 16), dtype=jnp.float32)  # NCHW-shaped parameter

    # Preferred (kernel-free) forward.
    out_fast = trainable_tensor_forward(param)
    jax.block_until_ready(out_fast)
    assert out_fast.shape == param.shape and out_fast.dtype == param.dtype
    assert bool(jnp.array_equal(out_fast, param))

    # Pallas copy path (kept for the exercise; lane-dense, grid-free).
    out_pallas = trainable_tensor_forward_pallas(param)
    jax.block_until_ready(out_pallas)
    assert out_pallas.shape == param.shape and out_pallas.dtype == param.dtype
    assert bool(jnp.array_equal(out_pallas, param))

    print("KERNEL_OK")
</pallas_src>

<mosaic_0001>
module attributes {stable_mosaic.version = 11 : i64} {
  func.func @_identity_kernel(%arg0: memref<16x128xf32, #tpu.memory_space<vmem>>, %arg1: memref<16x128xf32, #tpu.memory_space<vmem>>) attributes {dimension_semantics = [], scalar_prefetch = 0 : i64, scratch_operands = 0 : i64, tpu.core_type = #tpu.core_type<tc>} {
    %c0 = arith.constant 0 : index
    %c0_0 = arith.constant 0 : index
    %0 = vector.load %arg0[%c0, %c0_0] : memref<16x128xf32, #tpu.memory_space<vmem>>, vector<16x128xf32>
    %c0_1 = arith.constant 0 : index
    %c0_2 = arith.constant 0 : index
    %1 = vector.load %arg1[%c0_1, %c0_2] : memref<16x128xf32, #tpu.memory_space<vmem>>, vector<16x128xf32>
    tpu.vector_store %arg1[%c0_1, %c0_2], %0 {strides = array<i32>} : memref<16x128xf32, #tpu.memory_space<vmem>>, vector<16x128xf32>,
    return
  }
}

</mosaic_0001>

<llo_original>
// kernel: tpu_custom_call.1
$region0: #{tpu_custom_call.1}
  #allocation0 [shape = 'u32[]', space=smem, size = 0x4, offset = 0x4, fixed_abs, tag = 'smem constant byte address 0x4 - core index']
  #allocation1 [shape = 'u32[144,128]{1,0:T(1,128)}', space=vmem, size = 0x12000, scoped, tag = 'internal scratch']
  %s0 = inlined_call_operand.hbm [shape: f32[16,128], index: 0, kind: input, shape index: {}]
  %s1 = inlined_call_operand.hbm [shape: f32[16,128], index: 1, kind: output, shape index: {}]
  %s2 = sld [smem:[#allocation0]]
  $region18: #{tpu_custom_call.1} parent=0
    _
  %s4 = ssub.s32 1, %s2
  %s5 = scalar_select 0, %s4, %s2
  $region1: #{tpu_custom_call.1} parent=0
    #allocation2 [shape = 'u8[8192]{0}', space=vmem, size = 0x2000, scoped, tag = 'input window, operand 0, single buffered']
    #allocation3 [shape = 's32[1]{0}', space=sflag, size = 0x4, scoped, tag = 'scoped memory for tpu_custom_call.1']
    #allocation4 [shape = 's32[1]{0}', space=sflag, size = 0x4, scoped, tag = 'scoped memory for tpu_custom_call.1']
    #allocation5 [shape = 'u8[8192]{0}', space=vmem, size = 0x2000, scoped, tag = 'output window, operand 0, single buffered']
    %6 = vsyncpa [#allocation3], 0
    %7 = vsyncpa [#allocation4], 0
    // Predicated region
    $region2: #{tpu_custom_call.1} parent=1 // pred_check
      _
    $region3: #{tpu_custom_call.1} parent=1 // pred_check_branch
      %9 = sbr.rel (0) target = $region5
    $region4: #{tpu_custom_call.1} parent=1 // pred_region
      %s11 = ssub.s32 256, 256
      %12 = vsyncadd [#allocation3], %s11
      %s13 = sshll.u32 [#allocation2], 4
      %s14 = int_to_ptr.vmem [resolvable:$true] %s13
      %19 = dma.hbm_to_vmem [thread:$0]  %s0, 256, %s14, [#allocation3], 128, 128, 8
    $region5: #{tpu_custom_call.1} parent=1 // pred_fallthru
      _
    // Predicated region
    $region6: #{tpu_custom_call.1} parent=1 // pred_check
      _
    $region7: #{tpu_custom_call.1} parent=1 // pred_check_branch
      %21 = sbr.rel (0) target = $region9
    $region8: #{tpu_custom_call.1} parent=1 // pred_region
      %22 = dma.done [#allocation3], 256
    $region9: #{tpu_custom_call.1} parent=1 // pred_fallthru
      _
    %v23 = vld [vmem:[#allocation2] sm:$0xff]
    %v24 = vld [vmem:[#allocation2 + $0x8] sm:$0xff]
    %25 = vst [vmem:[#allocation5] sm:$0xff] %v23
    %26 = vst [vmem:[#allocation5 + $0x8] sm:$0xff] %v24
    // Predicated region
    $region10: #{tpu_custom_call.1} parent=1 // pred_check
      _
    $region11: #{tpu_custom_call.1} parent=1 // pred_check_branch
      %28 = sbr.rel (0) target = $region13
    $region12: #{tpu_custom_call.1} parent=1 // pred_region
      %s30 = ssub.s32 256, 256
      %31 = vsyncadd [#allocation4], %s30
      %s32 = sshll.u32 [#allocation5], 4
      %s33 = int_to_ptr.vmem [resolvable:$true] %s32
      %38 = dma.vmem_to_hbm [thread:$0]  %s33, 256, %s1, [#allocation4], 128, 128, 8
    $region13: #{tpu_custom_call.1} parent=1 // pred_fallthru
      _
    // Predicated region
    $region14: #{tpu_custom_call.1} parent=1 // pred_check
      _
    $region15: #{tpu_custom_call.1} parent=1 // pred_check_branch
      %40 = sbr.rel (0) target = $region17
    $region16: #{tpu_custom_call.1} parent=1 // pred_region
      %41 = dma.done [#allocation4], 256
    $region17: #{tpu_custom_call.1} parent=1 // pred_fallthru
      _
    %42 = vsyncpa [#allocation3], 1
    %43 = vsyncpa [#allocation4], 1

</llo_original>
